<compile_context>
chip_gen: v6e
topology: v6e:2x2x1
jax: 0.10.0
libtpu: 0.0.40
codegen_flags: <defaults>
</compile_context>

<pallas_src>
import jax
import jax.numpy as jnp
from jax.experimental import pallas as pl
from jax.experimental.pallas import tpu as pltpu


# --------------------------------------------------------------------------
# Kernel body: one (i, j, k) grid step of
#   out = x @ W^T + bias + alpha * ((x @ A^T) @ B^T)
# with W pre-transposed to (K, N), A to (K, r), bt = (alpha * B)^T.
# --------------------------------------------------------------------------
def _linear_lora_kernel(x_ref, wt_ref, b_ref, at_ref, bt_ref, o_ref,
                        acc_ref, xa_ref):
    j = pl.program_id(1)
    k = pl.program_id(2)

    @pl.when(k == 0)
    def _init_acc():
        acc_ref[...] = jnp.zeros_like(acc_ref)

    # xa persists across the whole j loop of a given i; only zero it when the
    # j == 0 sweep starts (gating this on j == 0 too is REQUIRED, otherwise
    # later j iterations would wipe the saved down-projection).
    @pl.when(jnp.logical_and(j == 0, k == 0))
    def _init_xa():
        xa_ref[...] = jnp.zeros_like(xa_ref)

    x = x_ref[...]                                         # (tm, tk)

    # Base linear: NN contraction on the MXU, f32 accumulation.
    acc_ref[...] += jnp.dot(x, wt_ref[...],
                            preferred_element_type=jnp.float32)

    # LoRA down-projection: independent of j, so compute it only on the j==0
    # sweep and reuse the (tm, r) accumulator for every other N tile.
    @pl.when(j == 0)
    def _lora_down():
        xa_ref[...] += jnp.dot(x, at_ref[...],
                               preferred_element_type=jnp.float32)

    @pl.when(k == pl.num_programs(2) - 1)
    def _finalize():
        # Rank-sized up-projection (alpha already folded into bt) + bias, f32.
        lora = jnp.dot(xa_ref[...], bt_ref[...],
                       preferred_element_type=jnp.float32)
        o_ref[...] = (acc_ref[...] + lora + b_ref[...]).astype(o_ref.dtype)


# --------------------------------------------------------------------------
# Tiling helpers
# --------------------------------------------------------------------------
def _default_tiles():
    """Per-generation tile defaults (tm, tn, tk)."""
    try:
        kind = jax.devices()[0].device_kind.lower()
    except Exception:  # pragma: no cover - defensive
        kind = ""
    if "v6" in kind:
        return 1024, 1024, 1024      # 128 MiB VMEM, highest compute roofline
    if "v7" in kind:
        return 512, 1024, 1024       # 64 MiB VMEM budget
    return 512, 512, 1024            # v5e and anything else


def _fit_tile(t, dim, mult):
    """Clamp tile to dim; keep it a multiple of `mult` when it actually tiles."""
    t = min(t, dim)
    if t >= dim:
        return dim
    return max(mult, (t // mult) * mult)


def _pick_tk(K, tk_max):
    """Largest multiple-of-128 divisor of K not exceeding tk_max."""
    if K <= tk_max:
        return K
    cap = (tk_max // 128) * 128
    for cand in range(cap, 0, -128):
        if K % cand == 0:
            return cand
    # TODO(synk): zero-pad K outside the kernel (or mask in-kernel) instead of
    # a full-K slab when K has no multiple-of-128 divisor.
    return K


# --------------------------------------------------------------------------
# One-time parameter prep (do this at load time in a real serving path, not
# per forward): transpose W / A, fold alpha into B^T, cast to compute dtype.
# --------------------------------------------------------------------------
def prepare_linear_lora_params(w, b, lora_a, lora_b, alpha,
                               compute_dtype=jnp.bfloat16):
    """
    w:       (N, K) nn.Linear weight (out, in)
    b:       (N,)   nn.Linear bias
    lora_a:  (r, K) lora_a.weight (rank, in)
    lora_b:  (N, r) lora_b.weight (out, rank)
    Returns (wt, b2, at, bt) in kernel-ready layouts/dtypes.
    """
    wt = jnp.asarray(w, dtype=compute_dtype).T                    # (K, N)
    at = jnp.asarray(lora_a, dtype=compute_dtype).T               # (K, r)
    bt = (jnp.asarray(lora_b, dtype=jnp.float32) * alpha).T       # (r, N) f32
    b2 = jnp.asarray(b, dtype=jnp.float32).reshape(1, -1)         # (1, N) f32
    return wt, b2, at, bt


# --------------------------------------------------------------------------
# pallas_call wrapper operating on prepared parameters.
# --------------------------------------------------------------------------
def linear_with_lora_apply(x, wt, b2, at, bt, *,
                           tm=None, tn=None, tk=None,
                           vmem_limit_bytes=None):
    M, K = x.shape
    K2, N = wt.shape
    Kr, r = at.shape
    assert K2 == K and Kr == K and bt.shape == (r, N) and b2.shape == (1, N)

    out_dtype = x.dtype
    compute_dtype = wt.dtype
    x = x.astype(compute_dtype)          # cast upstream, not inside the kernel

    dtm, dtn, dtk = _default_tiles()
    tm = dtm if tm is None else tm
    tn = dtn if tn is None else tn
    tk = dtk if tk is None else tk

    tm = _fit_tile(tm, M, 16)            # multiple of 16 for bf16 sublane packing
    tn = _fit_tile(tn, N, 128)
    tk = _pick_tk(K, tk)

    grid_i, grid_j, grid_k = pl.cdiv(M, tm), pl.cdiv(N, tn), pl.cdiv(K, tk)
    grid = (grid_i, grid_j, grid_k)

    in_item = jnp.dtype(compute_dtype).itemsize
    out_item = jnp.dtype(out_dtype).itemsize

    if vmem_limit_bytes is None:
        footprint = (
            2 * (tm * tk + tk * tn) * in_item        # double-buffered x, W tiles
            + 2 * tm * tn * out_item                 # double-buffered out tile
            + 4 * tm * tn                            # f32 accumulator
            + 4 * tm * max(r, 128)                   # lane-padded xa scratch
            + 2 * (tk * r * in_item + (r + 1) * tn * 4)  # A, bt, bias tiles
        )
        vmem_limit_bytes = min(max(int(footprint * 1.5) + (4 << 20), 32 << 20),
                               96 << 20)

    # Advisory cost: x@A^T is done once per i (j==0 gating), not per (i, j).
    cost = pl.CostEstimate(
        flops=2 * M * N * K + 2 * M * r * K + 2 * M * r * N,
        transcendentals=0,
        bytes_accessed=int(
            M * K * in_item * grid_j            # x re-read per N tile
            + K * N * in_item * grid_i          # W re-read per M tile
            + K * r * in_item * grid_i          # A (j==0 sweep only)
            + (r + 1) * N * 4 * grid_i          # bt + bias
            + M * N * out_item),                # output written once
    )

    return pl.pallas_call(
        _linear_lora_kernel,
        out_shape=jax.ShapeDtypeStruct((M, N), out_dtype),
        grid_spec=pltpu.PrefetchScalarGridSpec(
            num_scalar_prefetch=0,
            grid=grid,
            in_specs=[
                pl.BlockSpec((tm, tk), lambda i, j, k: (i, k)),   # x tile
                pl.BlockSpec((tk, tn), lambda i, j, k: (k, j)),   # W^T tile (K, N)
                pl.BlockSpec((1, tn), lambda i, j, k: (0, j)),    # bias tile
                pl.BlockSpec((tk, r), lambda i, j, k: (k, 0)),    # A^T tile (K, r)
                pl.BlockSpec((r, tn), lambda i, j, k: (0, j)),    # (alpha*B)^T tile
            ],
            out_specs=pl.BlockSpec((tm, tn), lambda i, j, k: (i, j)),
            scratch_shapes=[
                pltpu.VMEM((tm, tn), jnp.float32),   # base accumulator
                pltpu.VMEM((tm, r), jnp.float32),    # LoRA x@A accumulator
            ],
        ),
        # j must be "arbitrary": the xa scratch is carried across the j loop,
        # so j may not be sharded across TensorCores. i stays "parallel" for
        # megacore sharding on v7x; K is the reduction axis.
        compiler_params=pltpu.CompilerParams(
            dimension_semantics=("parallel", "arbitrary", "arbitrary"),
            vmem_limit_bytes=vmem_limit_bytes,
        ),
        cost_estimate=cost,
    )(x, wt, b2, at, bt)


# --------------------------------------------------------------------------
# Convenience entry point taking raw PyTorch-layout parameters.
# --------------------------------------------------------------------------
def linear_with_lora(x, w, b, lora_a, lora_b, alpha, *,
                     compute_dtype=jnp.bfloat16,
                     tm=None, tn=None, tk=None, vmem_limit_bytes=None):
    wt, b2, at, bt = prepare_linear_lora_params(
        w, b, lora_a, lora_b, alpha, compute_dtype=compute_dtype)
    return linear_with_lora_apply(x, wt, b2, at, bt, tm=tm, tn=tn, tk=tk,
                                  vmem_limit_bytes=vmem_limit_bytes)


if __name__ == "__main__":
    # Small shapes consistent with nn.Linear(in_features=32, out_features=64),
    # rank=4, alpha=2.0, batch=8.
    batch, in_features, out_features, rank = 8, 32, 64, 4
    alpha = 2.0

    key = jax.random.PRNGKey(0)
    kx, kw, kb, ka, kb2 = jax.random.split(key, 5)

    x = jax.random.normal(kx, (batch, in_features), dtype=jnp.float32)
    w = jax.random.normal(kw, (out_features, in_features), dtype=jnp.float32) * 0.1
    bias = jax.random.normal(kb, (out_features,), dtype=jnp.float32) * 0.1
    lora_a = jax.random.normal(ka, (rank, in_features), dtype=jnp.float32) * 0.1
    lora_b = jax.random.normal(kb2, (out_features, rank), dtype=jnp.float32) * 0.1

    # Pure-JAX reference (PyTorch semantics).
    ref = (x @ w.T + bias) + alpha * ((x @ lora_a.T) @ lora_b.T)

    # Exact-precision path: compute in f32, tight check.
    out_f32 = jax.block_until_ready(
        linear_with_lora(x, w, bias, lora_a, lora_b, alpha,
                         compute_dtype=jnp.float32))
    assert out_f32.shape == (batch, out_features)
    assert jnp.allclose(out_f32, ref, atol=1e-2, rtol=1e-2), "f32 path mismatch"

    # Default fast path: bf16 MXU matmuls with f32 accumulation, loose check.
    out = jax.block_until_ready(
        linear_with_lora(x, w, bias, lora_a, lora_b, alpha))
    assert out.shape == (batch, out_features)
    assert jnp.allclose(out.astype(jnp.float32), ref,
                        atol=5e-2, rtol=5e-2), "bf16 path mismatch"

    print("KERNEL_OK")
</pallas_src>

<mosaic_0001>
module attributes {stable_mosaic.version = 11 : i64} {
  func.func @_linear_lora_kernel(%arg0: i32, %arg1: i32, %arg2: i32, %arg3: memref<8x32xf32, #tpu.memory_space<vmem>>, %arg4: memref<32x64xf32, #tpu.memory_space<vmem>>, %arg5: memref<1x64xf32, #tpu.memory_space<vmem>>, %arg6: memref<32x4xf32, #tpu.memory_space<vmem>>, %arg7: memref<4x64xf32, #tpu.memory_space<vmem>>, %arg8: memref<8x64xf32, #tpu.memory_space<vmem>>, %arg9: memref<8x64xf32, #tpu.memory_space<vmem>>, %arg10: memref<8x4xf32, #tpu.memory_space<vmem>>) attributes {dimension_semantics = [#tpu.dimension_semantics<parallel>, #tpu.dimension_semantics<arbitrary>, #tpu.dimension_semantics<arbitrary>], iteration_bounds = array<i64: 1, 1, 1>, scalar_prefetch = 0 : i64, scratch_operands = 2 : i64, tpu.core_type = #tpu.core_type<tc>, window_params = [{transform_indices = @transform_0, window_bounds = array<i64: 8, 32>}, {transform_indices = @transform_1, window_bounds = array<i64: 32, 64>}, {transform_indices = @transform_2, window_bounds = array<i64: 1, 64>}, {transform_indices = @transform_3, window_bounds = array<i64: 32, 4>}, {transform_indices = @transform_4, window_bounds = array<i64: 4, 64>}, {transform_indices = @transform_5, window_bounds = array<i64: 8, 64>}]} {
    %c0_i32 = arith.constant 0 : i32
    %0 = arith.cmpi eq, %arg2, %c0_i32 : i32
    %1 = arith.extui %0 : i1 to i32
    %c0_i32_0 = arith.constant 0 : i32
    %2 = arith.cmpi ne, %1, %c0_i32_0 : i32
    scf.if %2 {
      %cst_15 = arith.constant 0.000000e+00 : f32
      %20 = vector.broadcast %cst_15 : f32 to vector<8x64xf32>
      %c0_16 = arith.constant 0 : index
      %c0_17 = arith.constant 0 : index
      %21 = vector.load %arg9[%c0_16, %c0_17] : memref<8x64xf32, #tpu.memory_space<vmem>>, vector<8x64xf32>
      tpu.vector_store %arg9[%c0_16, %c0_17], %20 {strides = array<i32>} : memref<8x64xf32, #tpu.memory_space<vmem>>, vector<8x64xf32>,
    } else {
    }
    %c0_i32_1 = arith.constant 0 : i32
    %3 = arith.cmpi eq, %arg1, %c0_i32_1 : i32
    %c0_i32_2 = arith.constant 0 : i32
    %4 = arith.cmpi eq, %arg2, %c0_i32_2 : i32
    %5 = arith.andi %3, %4 : i1
    %6 = arith.extui %5 : i1 to i32
    %c0_i32_3 = arith.constant 0 : i32
    %7 = arith.cmpi ne, %6, %c0_i32_3 : i32
    scf.if %7 {
      %cst_15 = arith.constant 0.000000e+00 : f32
      %20 = vector.broadcast %cst_15 : f32 to vector<8x4xf32>
      %c0_16 = arith.constant 0 : index
      %c0_17 = arith.constant 0 : index
      %21 = vector.load %arg10[%c0_16, %c0_17] : memref<8x4xf32, #tpu.memory_space<vmem>>, vector<8x4xf32>
      tpu.vector_store %arg10[%c0_16, %c0_17], %20 {strides = array<i32>} : memref<8x4xf32, #tpu.memory_space<vmem>>, vector<8x4xf32>,
    } else {
    }
    %c0 = arith.constant 0 : index
    %c0_4 = arith.constant 0 : index
    %8 = vector.load %arg3[%c0, %c0_4] : memref<8x32xf32, #tpu.memory_space<vmem>>, vector<8x32xf32>
    %c0_5 = arith.constant 0 : index
    %c0_6 = arith.constant 0 : index
    %9 = vector.load %arg9[%c0_5, %c0_6] : memref<8x64xf32, #tpu.memory_space<vmem>>, vector<8x64xf32>
    %c0_7 = arith.constant 0 : index
    %c0_8 = arith.constant 0 : index
    %10 = vector.load %arg4[%c0_7, %c0_8] : memref<32x64xf32, #tpu.memory_space<vmem>>, vector<32x64xf32>
    %cst = arith.constant dense<0.000000e+00> : vector<8x64xf32>
    %11 = tpu.matmul %8, %10, %cst {dimension_numbers = #tpu.dot_dimension_numbers<[1], [0], [0], [1], [0, 0, 1, 1], [], []>} : vector<8x32xf32>, vector<32x64xf32>, vector<8x64xf32> -> vector<8x64xf32>
    %12 = arith.addf %9, %11 : vector<8x64xf32>
    %c0_9 = arith.constant 0 : index
    %c0_10 = arith.constant 0 : index
    %13 = vector.load %arg9[%c0_9, %c0_10] : memref<8x64xf32, #tpu.memory_space<vmem>>, vector<8x64xf32>
    tpu.vector_store %arg9[%c0_9, %c0_10], %12 {strides = array<i32>} : memref<8x64xf32, #tpu.memory_space<vmem>>, vector<8x64xf32>,
    %c0_i32_11 = arith.constant 0 : i32
    %14 = arith.cmpi eq, %arg1, %c0_i32_11 : i32
    %15 = arith.extui %14 : i1 to i32
    %c0_i32_12 = arith.constant 0 : i32
    %16 = arith.cmpi ne, %15, %c0_i32_12 : i32
    scf.if %16 {
      %c0_15 = arith.constant 0 : index
      %c0_16 = arith.constant 0 : index
      %20 = vector.load %arg10[%c0_15, %c0_16] : memref<8x4xf32, #tpu.memory_space<vmem>>, vector<8x4xf32>
      %c0_17 = arith.constant 0 : index
      %c0_18 = arith.constant 0 : index
      %21 = vector.load %arg6[%c0_17, %c0_18] : memref<32x4xf32, #tpu.memory_space<vmem>>, vector<32x4xf32>
      %cst_19 = arith.constant dense<0.000000e+00> : vector<8x4xf32>
      %22 = tpu.matmul %8, %21, %cst_19 {dimension_numbers = #tpu.dot_dimension_numbers<[1], [0], [0], [1], [0, 0, 1, 1], [], []>} : vector<8x32xf32>, vector<32x4xf32>, vector<8x4xf32> -> vector<8x4xf32>
      %23 = arith.addf %20, %22 : vector<8x4xf32>
      %c0_20 = arith.constant 0 : index
      %c0_21 = arith.constant 0 : index
      %24 = vector.load %arg10[%c0_20, %c0_21] : memref<8x4xf32, #tpu.memory_space<vmem>>, vector<8x4xf32>
      tpu.vector_store %arg10[%c0_20, %c0_21], %23 {strides = array<i32>} : memref<8x4xf32, #tpu.memory_space<vmem>>, vector<8x4xf32>,
    } else {
    }
    %c0_i32_13 = arith.constant 0 : i32
    %17 = arith.cmpi eq, %arg2, %c0_i32_13 : i32
    %18 = arith.extui %17 : i1 to i32
    %c0_i32_14 = arith.constant 0 : i32
    %19 = arith.cmpi ne, %18, %c0_i32_14 : i32
    scf.if %19 {
      %c0_15 = arith.constant 0 : index
      %c0_16 = arith.constant 0 : index
      %20 = vector.load %arg10[%c0_15, %c0_16] : memref<8x4xf32, #tpu.memory_space<vmem>>, vector<8x4xf32>
      %c0_17 = arith.constant 0 : index
      %c0_18 = arith.constant 0 : index
      %21 = vector.load %arg7[%c0_17, %c0_18] : memref<4x64xf32, #tpu.memory_space<vmem>>, vector<4x64xf32>
      %cst_19 = arith.constant dense<0.000000e+00> : vector<8x64xf32>
      %22 = tpu.matmul %20, %21, %cst_19 {dimension_numbers = #tpu.dot_dimension_numbers<[1], [0], [0], [1], [0, 0, 1, 1], [], []>} : vector<8x4xf32>, vector<4x64xf32>, vector<8x64xf32> -> vector<8x64xf32>
      %c0_20 = arith.constant 0 : index
      %c0_21 = arith.constant 0 : index
      %23 = vector.load %arg9[%c0_20, %c0_21] : memref<8x64xf32, #tpu.memory_space<vmem>>, vector<8x64xf32>
      %24 = arith.addf %23, %22 : vector<8x64xf32>
      %c0_22 = arith.constant 0 : index
      %c0_23 = arith.constant 0 : index
      %25 = vector.load %arg5[%c0_22, %c0_23] : memref<1x64xf32, #tpu.memory_space<vmem>>, vector<1x64xf32>
      %26 = vector.broadcast %25 : vector<1x64xf32> to vector<8x64xf32>
      %27 = arith.addf %24, %26 : vector<8x64xf32>
      %c0_24 = arith.constant 0 : index
      %c0_25 = arith.constant 0 : index
      %28 = vector.load %arg8[%c0_24, %c0_25] : memref<8x64xf32, #tpu.memory_space<vmem>>, vector<8x64xf32>
      tpu.vector_store %arg8[%c0_24, %c0_25], %27 {strides = array<i32>} : memref<8x64xf32, #tpu.memory_space<vmem>>, vector<8x64xf32>,
    } else {
    }
    return
  }
  func.func @transform_0(%arg0: i32, %arg1: i32, %arg2: i32) -> (i32, i32) {
    %c0_i32 = arith.constant 0 : i32
    return %arg0, %arg2 : i32, i32
  }
  func.func @transform_1(%arg0: i32, %arg1: i32, %arg2: i32) -> (i32, i32) {
    %c0_i32 = arith.constant 0 : i32
    return %arg2, %arg1 : i32, i32
  }
  func.func @transform_2(%arg0: i32, %arg1: i32, %arg2: i32) -> (i32, i32) {
    %c0_i32 = arith.constant 0 : i32
    %c0_i32_0 = arith.constant 0 : i32
    return %c0_i32, %arg1 : i32, i32
  }
  func.func @transform_3(%arg0: i32, %arg1: i32, %arg2: i32) -> (i32, i32) {
    %c0_i32 = arith.constant 0 : i32
    %c0_i32_0 = arith.constant 0 : i32
    return %arg2, %c0_i32 : i32, i32
  }
  func.func @transform_4(%arg0: i32, %arg1: i32, %arg2: i32) -> (i32, i32) {
    %c0_i32 = arith.constant 0 : i32
    %c0_i32_0 = arith.constant 0 : i32
    return %c0_i32, %arg1 : i32, i32
  }
  func.func @transform_5(%arg0: i32, %arg1: i32, %arg2: i32) -> (i32, i32) {
    %c0_i32 = arith.constant 0 : i32
    return %arg0, %arg1 : i32, i32
  }
}

</mosaic_0001>

<llo_original>
// kernel: tpu_custom_call.1
$region0: #{tpu_custom_call.1}
  #allocation0 [shape = 'u32[]', space=smem, size = 0x4, offset = 0x4, fixed_abs, tag = 'smem constant byte address 0x4 - core index']
  #allocation1 [shape = 'u32[144,128]{1,0:T(1,128)}', space=vmem, size = 0x12000, scoped, tag = 'internal scratch']
  #allocation2 [shape = 'f32[8,64]{1,0:T(8,128)}', space=vmem, size = 0x1000, scoped, tag = 'scratch operand']
  #allocation3 [shape = 'f32[8,4]{1,0:T(8,128)}', space=vmem, size = 0x1000, scoped, tag = 'scratch operand']
  %s0 = inlined_call_operand.hbm [shape: f32[8,32], index: 0, kind: input, shape index: {}]
  %s1 = inlined_call_operand.vmem [shape: f32[32,64], index: 1, kind: input, shape index: {}]
  %s2 = inlined_call_operand.vmem [shape: f32[1,64], index: 2, kind: input, shape index: {}]
  %s3 = inlined_call_operand.vmem [shape: f32[32,4], index: 3, kind: input, shape index: {}]
  %s4 = inlined_call_operand.vmem [shape: f32[4,64], index: 4, kind: input, shape index: {}]
  %s5 = inlined_call_operand.hbm [shape: f32[8,64], index: 5, kind: output, shape index: {}]
  %s6 = sld [smem:[#allocation0]]
  $region50: #{tpu_custom_call.1} parent=0
    _
  %s8 = ssub.s32 1, %s6
  %s9 = scalar_select 0, %s8, %s6
  $region1: #{tpu_custom_call.1} parent=0
    #allocation4 [shape = 'u8[4096]{0}', space=vmem, size = 0x1000, scoped, tag = 'input window, operand 0, single buffered']
    #allocation5 [shape = 's32[1]{0}', space=sflag, size = 0x4, scoped, tag = 'scoped memory for tpu_custom_call.1']
    #allocation6 [shape = 's32[1]{0}', space=sflag, size = 0x4, scoped, tag = 'scoped memory for tpu_custom_call.1']
    #allocation7 [shape = 'u8[4096]{0}', space=vmem, size = 0x1000, scoped, tag = 'output window, operand 0, single buffered']
    %10 = vsyncpa [#allocation5], 0
    %11 = vsyncpa [#allocation6], 0
    // Predicated region
    $region2: #{tpu_custom_call.1} parent=1 // pred_check
      _
    $region3: #{tpu_custom_call.1} parent=1 // pred_check_branch
      %13 = sbr.rel (0) target = $region5
    $region4: #{tpu_custom_call.1} parent=1 // pred_region
      %s15 = ssub.s32 128, 128
      %16 = vsyncadd [#allocation5], %s15
      %s18 = sshll.u32 [#allocation4], 4
      %s19 = int_to_ptr.vmem [resolvable:$true] %s18
      %21 = dma.hbm_to_vmem [thread:$0]  %s0, 128, %s19, [#allocation5]
    $region5: #{tpu_custom_call.1} parent=1 // pred_fallthru
      _
    // Predicated region
    $region6: #{tpu_custom_call.1} parent=1 // pred_check
      _
    $region7: #{tpu_custom_call.1} parent=1 // pred_check_branch
      %23 = sbr.rel (0) target = $region9
    $region8: #{tpu_custom_call.1} parent=1 // pred_region
      _
    $region9: #{tpu_custom_call.1} parent=1 // pred_fallthru
      _
    // Predicated region
    $region10: #{tpu_custom_call.1} parent=1 // pred_check
      _
    $region11: #{tpu_custom_call.1} parent=1 // pred_check_branch
      %25 = sbr.rel (0) target = $region13
    $region12: #{tpu_custom_call.1} parent=1 // pred_region
      _
    $region13: #{tpu_custom_call.1} parent=1 // pred_fallthru
      _
    // Predicated region
    $region14: #{tpu_custom_call.1} parent=1 // pred_check
      _
    $region15: #{tpu_custom_call.1} parent=1 // pred_check_branch
      %27 = sbr.rel (0) target = $region17
    $region16: #{tpu_custom_call.1} parent=1 // pred_region
      _
    $region17: #{tpu_custom_call.1} parent=1 // pred_fallthru
      _
    // Predicated region
    $region18: #{tpu_custom_call.1} parent=1 // pred_check
      _
    $region19: #{tpu_custom_call.1} parent=1 // pred_check_branch
      %29 = sbr.rel (0) target = $region21
    $region20: #{tpu_custom_call.1} parent=1 // pred_region
      _
    $region21: #{tpu_custom_call.1} parent=1 // pred_fallthru
      _
    // Predicated region
    $region22: #{tpu_custom_call.1} parent=1 // pred_check
      _
    $region23: #{tpu_custom_call.1} parent=1 // pred_check_branch
      %31 = sbr.rel (0) target = $region25
    $region24: #{tpu_custom_call.1} parent=1 // pred_region
      %32 = dma.done [#allocation5], 128
    $region25: #{tpu_custom_call.1} parent=1 // pred_fallthru
      _
    %p33 = scmp.eq.s32.totalorder 0, 0
    // Predicated region
    $region26: #{tpu_custom_call.1} parent=1 // pred_check
      %p34 = pneg %p33
    $region27: #{tpu_custom_call.1} parent=1 // pred_check_branch
      %36 = sbr.rel (%p34) target = $region29
    $region28: #{tpu_custom_call.1} parent=1 // pred_region
      %vm37 = vcmask 523264
      %38 = vst.msk [vmem:[#allocation2] sm:$0xff] %vm37, 0.0
    $region29: #{tpu_custom_call.1} parent=1 // pred_fallthru
      _
    %p39 = scmp.eq.s32.totalorder 0, 0
    %p40 = pnand %p39, %p33
    %p41 = pneg %p40
    // Predicated region
    $region30: #{tpu_custom_call.1} parent=1 // pred_check
      _
    $region31: #{tpu_custom_call.1} parent=1 // pred_check_branch
      %43 = sbr.rel (%p40) target = $region33
    $region32: #{tpu_custom_call.1} parent=1 // pred_region
      %vm44 = vcmask 31744
      %45 = vst.msk [vmem:[#allocation3] sm:$0xff] %vm44, 0.0
    $region33: #{tpu_custom_call.1} parent=1 // pred_fallthru
      _
    %v46 = vld [vmem:[#allocation4] sm:$0xff]
    %v47 = vld [vmem:[#allocation2] sm:$0xff]
    %v48 = vld [vmem:[%s1] sm:$0xff]
    %v49 = vld [vmem:[%s1 + $0x8] sm:$0xff]
    %v50 = vld [vmem:[%s1 + $0x10] sm:$0xff]
    %v51 = vld [vmem:[%s1 + $0x18] sm:$0xff]
    %vm52 = vcmask 261120
    %v54 = vsel %vm52, %v46, 0
    %56 = vmatprep.subr.mxu0 0.0
    %57 = vmatpush1.msra.mxu0 0.0
    %58 = vmatprep.subr.mxu0 0.0
    %59 = vmatpush1.msra.mxu0 0.0
    %60 = vmatprep.subr.mxu0 0.0
    %61 = vmatpush1.msra.mxu0 0.0
    %62 = vmatprep.subr.mxu0 0.0
    %63 = vmatpush1.msra.mxu0 0.0
    %64 = vmatprep.subr.mxu0 0.0
    %65 = vmatpush1.msra.mxu0 0.0
    %66 = vmatprep.subr.mxu0 0.0
    %67 = vmatpush1.msra.mxu0 0.0
    %68 = vmatprep.subr.mxu0 0.0
    %69 = vmatpush1.msra.mxu0 0.0
    %70 = vmatprep.subr.mxu0 0.0
    %71 = vmatpush1.msra.mxu0 0.0
    %72 = vmatprep.subr.mxu0 0.0
    %73 = vmatpush1.msra.mxu0 0.0
    %74 = vmatprep.subr.mxu0 0.0
    %75 = vmatpush1.msra.mxu0 0.0
    %76 = vmatprep.subr.mxu0 0.0
    %77 = vmatpush1.msra.mxu0 0.0
    %78 = vmatprep.subr.mxu0 0.0
    %79 = vmatpush1.msra.mxu0 0.0
    %80 = vmatprep.subr.mxu0 0.0
    %81 = vmatpush1.msra.mxu0 %v51
    %82 = vmatprep.subr.mxu0 0.0
    %83 = vmatpush1.msra.mxu0 %v50
    %84 = vmatprep.subr.mxu0 0.0
    %85 = vmatpush1.msra.mxu0 %v49
    %86 = vmatprep.subr.mxu0 0.0
    %87 = vmatpush1.msra.mxu0 %v48
    %88 = vmatprep.subr.mxu0 0.0
    %89 = vmatpush2.msra.mxu0 0.0
    %90 = vmatprep.subr.mxu0 0.0
    %91 = vmatpush2.msra.mxu0 0.0
    %92 = vmatprep.subr.mxu0 0.0
    %93 = vmatpush2.msra.mxu0 0.0
    %94 = vmatprep.subr.mxu0 0.0
    %95 = vmatpush2.msra.mxu0 0.0
    %96 = vmatprep.subr.mxu0 0.0
    %97 = vmatpush2.msra.mxu0 0.0
    %98 = vmatprep.subr.mxu0 0.0
    %99 = vmatpush2.msra.mxu0 0.0
    %100 = vmatprep.subr.mxu0 0.0
    %101 = vmatpush2.msra.mxu0 0.0
    %102 = vmatprep.subr.mxu0 0.0
    %103 = vmatpush2.msra.mxu0 0.0
    %104 = vmatprep.subr.mxu0 0.0
    %105 = vmatpush2.msra.mxu0 0.0
    %106 = vmatprep.subr.mxu0 0.0
    %107 = vmatpush2.msra.mxu0 0.0
    %108 = vmatprep.subr.mxu0 0.0
    %109 = vmatpush2.msra.mxu0 0.0
    %110 = vmatprep.subr.mxu0 0.0
    %111 = vmatpush2.msra.mxu0 0.0
    %112 = vmatprep.subr.mxu0 0.0
    %113 = vmatpush2.msra.mxu0 0.0
    %114 = vmatprep.subr.mxu0 0.0
    %115 = vmatpush2.msra.mxu0 0.0
    %116 = vmatprep.subr.mxu0 0.0
    %117 = vmatpush2.msra.mxu0 0.0
    %118 = vmatprep.subr.mxu0 0.0
    %119 = vmatpush2.msra.mxu0 0.0
    %120 = vmatprep.mubr.f32.mxu0 0.0
    %121 = vmatmul.mubr.f32.gmra.mxu0 %v54
    %v122 = vpop.f32.mrf.mxu0
    %v123 = vadd.f32 0.0, %v122
    %v124 = vpop.f32.mrf.mxu0
    %125 = vdwg.mxu0
    %v126 = vadd.f32 %v47, %v123
    %vm127 = vcmask 523264
    %128 = vst.msk [vmem:[#allocation2] sm:$0xff] %vm127, %v126
    // Predicated region
    $region34: #{tpu_custom_call.1} parent=1 // pred_check
      %p129 = pneg %p39
    $region35: #{tpu_custom_call.1} parent=1 // pred_check_branch
      %131 = sbr.rel (%p129) target = $region37
    $region36: #{tpu_custom_call.1} parent=1 // pred_region
      %v132 = vld [vmem:[#allocation3] sm:$0xff]
      %v133 = vld [vmem:[%s3] sm:$0xff]
      %v134 = vld [vmem:[%s3 + $0x8] sm:$0xff]
      %v135 = vld [vmem:[%s3 + $0x10] sm:$0xff]
      %v136 = vld [vmem:[%s3 + $0x18] sm:$0xff]
      %137 = vmatprep.subr.mxu0 0.0
      %138 = vmatpush1.msra.mxu0 0.0
      %139 = vmatprep.subr.mxu0 0.0
      %140 = vmatpush1.msra.mxu0 0.0
      %141 = vmatprep.subr.mxu0 0.0
      %142 = vmatpush1.msra.mxu0 0.0
      %143 = vmatprep.subr.mxu0 0.0
      %144 = vmatpush1.msra.mxu0 0.0
      %145 = vmatprep.subr.mxu0 0.0
      %146 = vmatpush1.msra.mxu0 0.0
      %147 = vmatprep.subr.mxu0 0.0
      %148 = vmatpush1.msra.mxu0 0.0
      %149 = vmatprep.subr.mxu0 0.0
      %150 = vmatpush1.msra.mxu0 0.0
      %151 = vmatprep.subr.mxu0 0.0
      %152 = vmatpush1.msra.mxu0 0.0
      %153 = vmatprep.subr.mxu0 0.0
      %154 = vmatpush1.msra.mxu0 0.0
      %155 = vmatprep.subr.mxu0 0.0
      %156 = vmatpush1.msra.mxu0 0.0
      %157 = vmatprep.subr.mxu0 0.0
      %158 = vmatpush1.msra.mxu0 0.0
      %159 = vmatprep.subr.mxu0 0.0
      %160 = vmatpush1.msra.mxu0 0.0
      %161 = vmatprep.subr.mxu0 0.0
      %162 = vmatpush1.msra.mxu0 %v136
      %163 = vmatprep.subr.mxu0 0.0
      %164 = vmatpush1.msra.mxu0 %v135
      %165 = vmatprep.subr.mxu0 0.0
      %166 = vmatpush1.msra.mxu0 %v134
      %167 = vmatprep.subr.mxu0 0.0
      %168 = vmatpush1.msra.mxu0 %v133
      %169 = vmatprep.subr.mxu0 0.0
      %170 = vmatpush2.msra.mxu0 0.0
      %171 = vmatprep.subr.mxu0 0.0
      %172 = vmatpush2.msra.mxu0 0.0
      %173 = vmatprep.subr.mxu0 0.0
      %174 = vmatpush2.msra.mxu0 0.0
      %175 = vmatprep.subr.mxu0 0.0
      %176 = vmatpush2.msra.mxu0 0.0
      %177 = vmatprep.subr.mxu0 0.0
      %178 = vmatpush2.msra.mxu0 0.0
      %179 = vmatprep.subr.mxu0 0.0
      %180 = vmatpush2.msra.mxu0 0.0
      %181 = vmatprep.subr.mxu0 0.0
      %182 = vmatpush2.msra.mxu0 0.0
      %183 = vmatprep.subr.mxu0 0.0
      %184 = vmatpush2.msra.mxu0 0.0
      %185 = vmatprep.subr.mxu0 0.0
      %186 = vmatpush2.msra.mxu0 0.0
      %187 = vmatprep.subr.mxu0 0.0
      %188 = vmatpush2.msra.mxu0 0.0
      %189 = vmatprep.subr.mxu0 0.0
      %190 = vmatpush2.msra.mxu0 0.0
      %191 = vmatprep.subr.mxu0 0.0
      %192 = vmatpush2.msra.mxu0 0.0
      %193 = vmatprep.subr.mxu0 0.0
      %194 = vmatpush2.msra.mxu0 0.0
      %195 = vmatprep.subr.mxu0 0.0
      %196 = vmatpush2.msra.mxu0 0.0
      %197 = vmatprep.subr.mxu0 0.0
      %198 = vmatpush2.msra.mxu0 0.0
      %199 = vmatprep.subr.mxu0 0.0
      %200 = vmatpush2.msra.mxu0 0.0
      %201 = vmatprep.mubr.f32.mxu0 0.0
      %202 = vmatmul.mubr.f32.gmra.mxu0 %v54
      %v203 = vpop.f32.mrf.mxu0
      %v204 = vadd.f32 0.0, %v203
      %v205 = vpop.f32.mrf.mxu0
      %206 = vdwg.mxu0
      %v207 = vadd.f32 %v132, %v204
      %vm208 = vcmask 31744
      %209 = vst.msk [vmem:[#allocation3] sm:$0xff] %vm208, %v207
    $region37: #{tpu_custom_call.1} parent=1 // pred_fallthru
      _
    // Predicated region
    $region38: #{tpu_custom_call.1} parent=1 // pred_check
      %p210 = pneg %p33
    $region39: #{tpu_custom_call.1} parent=1 // pred_check_branch
      %212 = sbr.rel (%p210) target = $region41
    $region40: #{tpu_custom_call.1} parent=1 // pred_region
      %v213 = vld [vmem:[#allocation3] sm:$0xff]
      %v214 = vld [vmem:[%s4] sm:$0xf]
      %vm215 = vcmask 31744
      %v217 = vsel %vm215, %v213, 0
      %vm219 = vcmask 1043456
      %v221 = vsel %vm219, %v214, 0
      %223 = vmatprep.subr.mxu0 0.0
      %224 = vmatpush1.msra.mxu0 0.0
      %225 = vmatprep.subr.mxu0 0.0
      %226 = vmatpush1.msra.mxu0 0.0
      %227 = vmatprep.subr.mxu0 0.0
      %228 = vmatpush1.msra.mxu0 0.0
      %229 = vmatprep.subr.mxu0 0.0
      %230 = vmatpush1.msra.mxu0 0.0
      %231 = vmatprep.subr.mxu0 0.0
      %232 = vmatpush1.msra.mxu0 0.0
      %233 = vmatprep.subr.mxu0 0.0
      %234 = vmatpush1.msra.mxu0 0.0
      %235 = vmatprep.subr.mxu0 0.0
      %236 = vmatpush1.msra.mxu0 0.0
      %237 = vmatprep.subr.mxu0 0.0
      %238 = vmatpush1.msra.mxu0 0.0
      %239 = vmatprep.subr.mxu0 0.0
      %240 = vmatpush1.msra.mxu0 0.0
      %241 = vmatprep.subr.mxu0 0.0
      %242 = vmatpush1.msra.mxu0 0.0
      %243 = vmatprep.subr.mxu0 0.0
      %244 = vmatpush1.msra.mxu0 0.0
      %245 = vmatprep.subr.mxu0 0.0
      %246 = vmatpush1.msra.mxu0 0.0
      %247 = vmatprep.subr.mxu0 0.0
      %248 = vmatpush1.msra.mxu0 0.0
      %249 = vmatprep.subr.mxu0 0.0
      %250 = vmatpush1.msra.mxu0 0.0
      %251 = vmatprep.subr.mxu0 0.0
      %252 = vmatpush1.msra.mxu0 0.0
      %253 = vmatprep.subr.mxu0 0.0
      %254 = vmatpush1.msra.mxu0 %v221
      %255 = vmatprep.subr.mxu0 0.0
      %256 = vmatpush2.msra.mxu0 0.0
      %257 = vmatprep.subr.mxu0 0.0
      %258 = vmatpush2.msra.mxu0 0.0
      %259 = vmatprep.subr.mxu0 0.0
      %260 = vmatpush2.msra.mxu0 0.0
      %261 = vmatprep.subr.mxu0 0.0
      %262 = vmatpush2.msra.mxu0 0.0
      %263 = vmatprep.subr.mxu0 0.0
      %264 = vmatpush2.msra.mxu0 0.0
      %265 = vmatprep.subr.mxu0 0.0
      %266 = vmatpush2.msra.mxu0 0.0
      %267 = vmatprep.subr.mxu0 0.0
      %268 = vmatpush2.msra.mxu0 0.0
      %269 = vmatprep.subr.mxu0 0.0
      %270 = vmatpush2.msra.mxu0 0.0
      %271 = vmatprep.subr.mxu0 0.0
      %272 = vmatpush2.msra.mxu0 0.0
      %273 = vmatprep.subr.mxu0 0.0
      %274 = vmatpush2.msra.mxu0 0.0
      %275 = vmatprep.subr.mxu0 0.0
      %276 = vmatpush2.msra.mxu0 0.0
      %277 = vmatprep.subr.mxu0 0.0
      %278 = vmatpush2.msra.mxu0 0.0
      %279 = vmatprep.subr.mxu0 0.0
      %280 = vmatpush2.msra.mxu0 0.0
      %281 = vmatprep.subr.mxu0 0.0
      %282 = vmatpush2.msra.mxu0 0.0
      %283 = vmatprep.subr.mxu0 0.0
      %284 = vmatpush2.msra.mxu0 0.0
      %285 = vmatprep.subr.mxu0 0.0
      %286 = vmatpush2.msra.mxu0 0.0
      %287 = vmatprep.mubr.f32.mxu0 0.0
      %288 = vmatmul.mubr.f32.gmra.mxu0 %v217
      %v289 = vpop.f32.mrf.mxu0
      %v290 = vadd.f32 0.0, %v289
      %v291 = vpop.f32.mrf.mxu0
      %292 = vdwg.mxu0
      %v293 = vld [vmem:[#allocation2] sm:$0xff]
      %v294 = vadd.f32 %v293, %v290
      %v295 = vld [vmem:[%s2] sm:$0x1]
      %v297 = vlaneseq
      %v298 = vshrl.u32 %v297, 7
      %v299 = vsub.s32 0, %v298
      %v300 = vrot.slane %v295, %v299
      %v302 = vadd.f32 %v294, %v300
      %303 = vst.msk [vmem:[#allocation7] sm:$0xff] %vm127, %v302
    $region41: #{tpu_custom_call.1} parent=1 // pred_fallthru
      _
    // Predicated region
    $region42: #{tpu_custom_call.1} parent=1 // pred_check
      _
    $region43: #{tpu_custom_call.1} parent=1 // pred_check_branch
      %305 = sbr.rel (0) target = $region45
    $region44: #{tpu_custom_call.1} parent=1 // pred_region
      %s307 = ssub.s32 128, 128
      %308 = vsyncadd [#allocation6], %s307
      %s310 = sshll.u32 [#allocation7], 4
      %s311 = int_to_ptr.vmem [resolvable:$true] %s310
      %313 = dma.vmem_to_hbm [thread:$0]  %s311, 128, %s5, [#allocation6]
    $region45: #{tpu_custom_call.1} parent=1 // pred_fallthru
      _
    // Predicated region
    $region46: #{tpu_custom_call.1} parent=1 // pred_check
      _
    $region47: #{tpu_custom_call.1} parent=1 // pred_check_branch
      %315 = sbr.rel (0) target = $region49
    $region48: #{tpu_custom_call.1} parent=1 // pred_region
      %316 = dma.done [#allocation6], 128
    $region49: #{tpu_custom_call.1} parent=1 // pred_fallthru
      _
    %317 = vsyncpa [#allocation5], 1
    %318 = vsyncpa [#allocation6], 1

</llo_original>
